<compile_context>
chip_gen: v7x
topology: tpu7x:2x2x1
jax: 0.10.0
libtpu: 0.0.40
codegen_flags: <defaults>
</compile_context>

<pallas_src>
import functools
import math

import jax
import jax.numpy as jnp
from jax.experimental import pallas as pl
from jax.experimental.pallas import tpu as pltpu


def _round_up(v: int, m: int) -> int:
    return (v + m - 1) // m * m


def _vmem_capacity_bytes(default: int = 64 * 1024 * 1024) -> int:
    """Per-TensorCore VMEM capacity; conservative (v7x-sized) fallback."""
    try:
        cap = getattr(pltpu.get_tpu_info(), "vmem_capacity_bytes", None)
        if cap:
            return int(cap)
    except Exception:
        pass
    return default


def _time_conv_kernel(x_ref, w_ref, o_ref, xcol_ref, *, b_tile, c_in, c_out,
                      k_size, l_in, l_out_pad):
    """One batch tile of the valid, stride-1, bias-free Conv1d.

    x_ref    : (b_tile*c_in, l_in)         input rows (batch merged into sublanes)
    w_ref    : (c_out, k_size*c_in)        im2col-flattened weight, resident (DMA'd once)
    o_ref    : (b_tile*c_out, l_out_pad)   lane-dense (multiple-of-128) output tile
    xcol_ref : (k_size*c_in, l_out_pad)    VMEM scratch: im2col block for one row
    """
    w = w_ref[...]  # hoisted: one small load, reused for every batch row

    for b in range(b_tile):  # static unroll (b_tile is capped in the wrapper)
        # Build the im2col block: row (k*c_in + c) holds x[b, c, l + k].
        # Columns beyond (l_in - k) are left as stale/uninitialized scratch;
        # they only ever feed output columns >= L_out, which the wrapper
        # slices off, so no zero-fill is needed.
        for k in range(k_size):
            avail = min(l_out_pad, l_in - k)  # >= L_out by construction
            xcol_ref[pl.ds(k * c_in, c_in), pl.ds(0, avail)] = (
                x_ref[pl.ds(b * c_in, c_in), pl.ds(k, avail)])
        # Single MXU matmul per row, contraction depth k_size*c_in, f32 acc.
        yb = jnp.dot(w, xcol_ref[...], preferred_element_type=jnp.float32)
        # Full-lane-width (unmasked) store of the (c_out, l_out_pad) slab.
        o_ref[pl.ds(b * c_out, c_out), :] = yb.astype(o_ref.dtype)


def time_conv_forward(x, weight, *, compute_dtype=jnp.bfloat16, b_tile=None):
    """Equivalent of Time_Conv.forward: Conv1d(bias=False, stride=1, padding=0).

    x       : (N, C_in, L)
    weight  : (C_out, C_in, K)          -- PyTorch Conv1d weight layout
    returns : (N, C_out, L - K + 1)     in x.dtype

    compute_dtype: dtype fed to the MXU (default bf16, f32 accumulation).
    Use jnp.float32 for an exact match of the f32 PyTorch forward.
    """
    n, c_in, l_in = x.shape
    c_out, c_in_w, k_size = weight.shape
    assert c_in == c_in_w, (c_in, c_in_w)
    l_out = l_in - k_size + 1
    assert l_out >= 1, (l_in, k_size)

    out_dtype = x.dtype
    l_out_pad = _round_up(l_out, 128)  # lane-dense output width
    cbytes = jnp.dtype(compute_dtype).itemsize
    obytes = jnp.dtype(out_dtype).itemsize

    # --- generation-aware VMEM budget (v5e/v6e: 128 MiB, v7x: 64 MiB / TC) ---
    vmem_limit = max(min(_vmem_capacity_bytes() * 3 // 4, 96 * 1024 * 1024),
                     16 * 1024 * 1024)
    budget = vmem_limit // 2  # headroom for compiler temps / spills

    # Pick B_TILE so per-step tiles are as big as the budget allows.
    fixed_bytes = (k_size * c_in * l_out_pad * cbytes        # im2col scratch
                   + 2 * c_out * k_size * c_in * cbytes)     # resident weight
    row_bytes = (2 * c_in * l_in * cbytes                    # x row, dbl-buffered
                 + 2 * c_out * l_out_pad * obytes            # out row, dbl-buffered
                 + c_out * l_out_pad * 4)                    # f32 accumulator
    if b_tile is None:
        b_tile = int(max(1, min(n, (budget - fixed_bytes) // max(row_bytes, 1),
                                64)))  # cap static unroll size

    # Keep the merged (batch*channel) leading dims sublane-divisible, unless a
    # single block covers the whole (padded) array (then block == full dim).
    sub_in = 8 * max(1, 4 // cbytes)    # 8 for f32 blocks, 16 for bf16 blocks
    sub_out = 8 * max(1, 4 // obytes)
    m = math.lcm(sub_in // math.gcd(c_in, sub_in),
                 sub_out // math.gcd(c_out, sub_out))
    if b_tile >= n:
        b_tile, n_pad = n, n
    else:
        b_tile = max(m, (b_tile // m) * m)
        n_pad = _round_up(n, b_tile)

    # --- wrapper-side layout plumbing (cheap / fusable) ---
    x_c = x.astype(compute_dtype)
    if n_pad != n:
        x_c = jnp.pad(x_c, ((0, n_pad - n), (0, 0), (0, 0)))
    x2 = x_c.reshape(n_pad * c_in, l_in)              # merge batch into sublanes
    # w2[o, k*c_in + c] = weight[o, c, k]   (matches in-kernel im2col row order)
    w2 = jnp.transpose(weight, (0, 2, 1)).reshape(c_out, k_size * c_in)
    w2 = w2.astype(compute_dtype)

    kernel = functools.partial(
        _time_conv_kernel, b_tile=b_tile, c_in=c_in, c_out=c_out,
        k_size=k_size, l_in=l_in, l_out_pad=l_out_pad)

    out2 = pl.pallas_call(
        kernel,
        out_shape=jax.ShapeDtypeStruct((n_pad * c_out, l_out_pad), out_dtype),
        grid_spec=pltpu.PrefetchScalarGridSpec(
            num_scalar_prefetch=0,
            grid=(n_pad // b_tile,),
            in_specs=[
                # One batch tile per grid step (batch*channels on sublanes).
                pl.BlockSpec((b_tile * c_in, l_in), lambda i: (i, 0)),
                # Constant block index -> weight DMA'd once, stays in VMEM.
                pl.BlockSpec((c_out, k_size * c_in), lambda i: (0, 0)),
            ],
            out_specs=pl.BlockSpec((b_tile * c_out, l_out_pad),
                                   lambda i: (i, 0)),
            scratch_shapes=[
                pltpu.VMEM((k_size * c_in, l_out_pad), compute_dtype),
            ],
        ),
        compiler_params=pltpu.CompilerParams(
            dimension_semantics=("parallel",),
            vmem_limit_bytes=int(vmem_limit),
        ),
    )(x2, w2)

    out = out2.reshape(n_pad, c_out, l_out_pad)
    return out[:n, :, :l_out]


if __name__ == "__main__":
    key = jax.random.PRNGKey(0)
    kx, kw = jax.random.split(key)

    # Small shapes consistent with Time_Conv: Conv1d input (N, C_in, L).
    N, C_IN, C_OUT, K, L = 2, 4, 8, 3, 16
    x = jax.random.normal(kx, (N, C_IN, L), dtype=jnp.float32)
    bound = 1.0 / (C_IN * K) ** 0.5  # PyTorch-style uniform init bound
    w = jax.random.uniform(kw, (C_OUT, C_IN, K), jnp.float32, -bound, bound)

    # Pure-JAX reference: matches torch.nn.Conv1d(..., bias=False).
    ref = jax.lax.conv_general_dilated(
        x, w, window_strides=(1,), padding="VALID",
        dimension_numbers=("NCH", "OIH", "NCH"),
    )

    # Exact f32 path.
    out_f32 = jax.block_until_ready(
        time_conv_forward(x, w, compute_dtype=jnp.float32))
    assert out_f32.shape == (N, C_OUT, L - K + 1), out_f32.shape
    assert jnp.allclose(out_f32, ref, atol=1e-5, rtol=1e-5), "f32 mismatch"

    # Default perf path: bf16 MXU inputs, f32 accumulation, f32 output.
    out_bf16 = jax.block_until_ready(time_conv_forward(x, w))
    assert out_bf16.shape == (N, C_OUT, L - K + 1), out_bf16.shape
    assert out_bf16.dtype == x.dtype
    assert jnp.allclose(out_bf16, ref, atol=5e-2, rtol=5e-2), "bf16 mismatch"

    print("KERNEL_OK")
</pallas_src>

<mosaic_0001>
module attributes {stable_mosaic.version = 11 : i64} {
  func.func @_time_conv_kernel(%arg0: i32, %arg1: memref<8x16xf32, #tpu.memory_space<vmem>>, %arg2: memref<8x12xf32, #tpu.memory_space<vmem>>, %arg3: memref<16x128xf32, #tpu.memory_space<vmem>>, %arg4: memref<12x128xf32, #tpu.memory_space<vmem>>) attributes {dimension_semantics = [#tpu.dimension_semantics<parallel>], iteration_bounds = array<i64: 1>, scalar_prefetch = 0 : i64, scratch_operands = 1 : i64, tpu.core_type = #tpu.core_type<tc>, window_params = [{transform_indices = @transform_0, window_bounds = array<i64: 8, 16>}, {pipeline_mode = #tpu.pipeline_mode<synchronous>, transform_indices = @transform_1, window_bounds = array<i64: 8, 12>}, {transform_indices = @transform_2, window_bounds = array<i64: 16, 128>}]} {
    %c0 = arith.constant 0 : index
    %c0_0 = arith.constant 0 : index
    %0 = vector.load %arg2[%c0, %c0_0] : memref<8x12xf32, #tpu.memory_space<vmem>>, vector<8x12xf32>
    %c0_1 = arith.constant 0 : index
    %c0_2 = arith.constant 0 : index
    %1 = vector.load %arg1[%c0_1, %c0_2] : memref<8x16xf32, #tpu.memory_space<vmem>>, vector<4x16xf32>
    %c0_3 = arith.constant 0 : index
    %c0_4 = arith.constant 0 : index
    %2 = vector.load %arg4[%c0_3, %c0_4] : memref<12x128xf32, #tpu.memory_space<vmem>>, vector<4x16xf32>
    tpu.vector_store %arg4[%c0_3, %c0_4], %1 {strides = array<i32>} : memref<12x128xf32, #tpu.memory_space<vmem>>, vector<4x16xf32>,
    %c0_5 = arith.constant 0 : index
    %c1 = arith.constant 1 : index
    %3 = vector.load %arg1[%c0_5, %c1] : memref<8x16xf32, #tpu.memory_space<vmem>>, vector<4x15xf32>
    %c4 = arith.constant 4 : index
    %c0_6 = arith.constant 0 : index
    %4 = vector.load %arg4[%c4, %c0_6] : memref<12x128xf32, #tpu.memory_space<vmem>>, vector<4x15xf32>
    tpu.vector_store %arg4[%c4, %c0_6], %3 {strides = array<i32>} : memref<12x128xf32, #tpu.memory_space<vmem>>, vector<4x15xf32>,
    %c0_7 = arith.constant 0 : index
    %c2 = arith.constant 2 : index
    %5 = vector.load %arg1[%c0_7, %c2] : memref<8x16xf32, #tpu.memory_space<vmem>>, vector<4x14xf32>
    %c8 = arith.constant 8 : index
    %c0_8 = arith.constant 0 : index
    %6 = vector.load %arg4[%c8, %c0_8] : memref<12x128xf32, #tpu.memory_space<vmem>>, vector<4x14xf32>
    tpu.vector_store %arg4[%c8, %c0_8], %5 {strides = array<i32>} : memref<12x128xf32, #tpu.memory_space<vmem>>, vector<4x14xf32>,
    %c0_9 = arith.constant 0 : index
    %c0_10 = arith.constant 0 : index
    %7 = vector.load %arg4[%c0_9, %c0_10] : memref<12x128xf32, #tpu.memory_space<vmem>>, vector<12x128xf32>
    %cst = arith.constant dense<0.000000e+00> : vector<8x128xf32>
    %8 = tpu.matmul %0, %7, %cst {dimension_numbers = #tpu.dot_dimension_numbers<[1], [0], [0], [1], [0, 0, 1, 1], [], []>} : vector<8x12xf32>, vector<12x128xf32>, vector<8x128xf32> -> vector<8x128xf32>
    %c0_11 = arith.constant 0 : index
    %c0_12 = arith.constant 0 : index
    %9 = vector.load %arg3[%c0_11, %c0_12] : memref<16x128xf32, #tpu.memory_space<vmem>>, vector<8x128xf32>
    tpu.vector_store %arg3[%c0_11, %c0_12], %8 {strides = array<i32>} : memref<16x128xf32, #tpu.memory_space<vmem>>, vector<8x128xf32>,
    %c4_13 = arith.constant 4 : index
    %c0_14 = arith.constant 0 : index
    %10 = vector.load %arg1[%c4_13, %c0_14] : memref<8x16xf32, #tpu.memory_space<vmem>>, vector<4x16xf32>
    %c0_15 = arith.constant 0 : index
    %c0_16 = arith.constant 0 : index
    %11 = vector.load %arg4[%c0_15, %c0_16] : memref<12x128xf32, #tpu.memory_space<vmem>>, vector<4x16xf32>
    tpu.vector_store %arg4[%c0_15, %c0_16], %10 {strides = array<i32>} : memref<12x128xf32, #tpu.memory_space<vmem>>, vector<4x16xf32>,
    %c4_17 = arith.constant 4 : index
    %c1_18 = arith.constant 1 : index
    %12 = vector.load %arg1[%c4_17, %c1_18] : memref<8x16xf32, #tpu.memory_space<vmem>>, vector<4x15xf32>
    %c4_19 = arith.constant 4 : index
    %c0_20 = arith.constant 0 : index
    %13 = vector.load %arg4[%c4_19, %c0_20] : memref<12x128xf32, #tpu.memory_space<vmem>>, vector<4x15xf32>
    tpu.vector_store %arg4[%c4_19, %c0_20], %12 {strides = array<i32>} : memref<12x128xf32, #tpu.memory_space<vmem>>, vector<4x15xf32>,
    %c4_21 = arith.constant 4 : index
    %c2_22 = arith.constant 2 : index
    %14 = vector.load %arg1[%c4_21, %c2_22] : memref<8x16xf32, #tpu.memory_space<vmem>>, vector<4x14xf32>
    %c8_23 = arith.constant 8 : index
    %c0_24 = arith.constant 0 : index
    %15 = vector.load %arg4[%c8_23, %c0_24] : memref<12x128xf32, #tpu.memory_space<vmem>>, vector<4x14xf32>
    tpu.vector_store %arg4[%c8_23, %c0_24], %14 {strides = array<i32>} : memref<12x128xf32, #tpu.memory_space<vmem>>, vector<4x14xf32>,
    %c0_25 = arith.constant 0 : index
    %c0_26 = arith.constant 0 : index
    %16 = vector.load %arg4[%c0_25, %c0_26] : memref<12x128xf32, #tpu.memory_space<vmem>>, vector<12x128xf32>
    %cst_27 = arith.constant dense<0.000000e+00> : vector<8x128xf32>
    %17 = tpu.matmul %0, %16, %cst_27 {dimension_numbers = #tpu.dot_dimension_numbers<[1], [0], [0], [1], [0, 0, 1, 1], [], []>} : vector<8x12xf32>, vector<12x128xf32>, vector<8x128xf32> -> vector<8x128xf32>
    %c8_28 = arith.constant 8 : index
    %c0_29 = arith.constant 0 : index
    %18 = vector.load %arg3[%c8_28, %c0_29] : memref<16x128xf32, #tpu.memory_space<vmem>>, vector<8x128xf32>
    tpu.vector_store %arg3[%c8_28, %c0_29], %17 {strides = array<i32>} : memref<16x128xf32, #tpu.memory_space<vmem>>, vector<8x128xf32>,
    return
  }
  func.func @transform_0(%arg0: i32) -> (i32, i32) {
    %c0_i32 = arith.constant 0 : i32
    %c0_i32_0 = arith.constant 0 : i32
    return %arg0, %c0_i32 : i32, i32
  }
  func.func @transform_1(%arg0: i32) -> (i32, i32) {
    %c0_i32 = arith.constant 0 : i32
    %c0_i32_0 = arith.constant 0 : i32
    %c0_i32_1 = arith.constant 0 : i32
    return %c0_i32, %c0_i32_0 : i32, i32
  }
  func.func @transform_2(%arg0: i32) -> (i32, i32) {
    %c0_i32 = arith.constant 0 : i32
    %c0_i32_0 = arith.constant 0 : i32
    return %arg0, %c0_i32 : i32, i32
  }
}

</mosaic_0001>

<llo_original>
// kernel: tpu_custom_call.1
$region0: #{tpu_custom_call.1}
  #allocation0 [shape = 'u32[]', space=smem, size = 0x4, offset = 0x4, fixed_abs, tag = 'smem constant byte address 0x4 - core index']
  #allocation1 [shape = 'u32[144,128]{1,0:T(1,128)}', space=vmem, size = 0x12000, scoped, tag = 'internal scratch']
  #allocation2 [shape = 'f32[12,128]{1,0:T(8,128)}', space=vmem, size = 0x2000, scoped, tag = 'scratch operand']
  %s0 = inlined_call_operand.hbm [shape: f32[8,16], index: 0, kind: input, shape index: {}]
  %s1 = inlined_call_operand.hbm [shape: f32[8,12], index: 1, kind: input, shape index: {}]
  %s2 = inlined_call_operand.hbm [shape: f32[16,128], index: 2, kind: output, shape index: {}]
  %s3 = sld [smem:[#allocation0]]
  $region26: #{tpu_custom_call.1} parent=0
    _
  %s5 = ssub.s32 1, %s3
  %s6 = scalar_select 0, %s5, %s3
  $region1: #{tpu_custom_call.1} parent=0
    #allocation3 [shape = 'u8[4096]{0}', space=vmem, size = 0x1000, scoped, tag = 'input window, operand 0, single buffered']
    #allocation4 [shape = 's32[1]{0}', space=sflag, size = 0x4, scoped, tag = 'scoped memory for tpu_custom_call.1']
    #allocation5 [shape = 's32[1]{0}', space=sflag, size = 0x4, scoped, tag = 'scoped memory for tpu_custom_call.1']
    #allocation6 [shape = 'u8[4096]{0}', space=vmem, size = 0x1000, scoped, tag = 'input window, operand 1, single buffered']
    #allocation7 [shape = 's32[1]{0}', space=sflag, size = 0x4, scoped, tag = 'scoped memory for tpu_custom_call.1']
    #allocation8 [shape = 'u8[8192]{0}', space=vmem, size = 0x2000, scoped, tag = 'output window, operand 0, single buffered']
    %7 = vsyncpa [#allocation4], 0
    %8 = vsyncpa [#allocation7], 0
    %9 = vsyncpa [#allocation5], 0
    // Predicated region
    $region2: #{tpu_custom_call.1} parent=1 // pred_check
      _
    $region3: #{tpu_custom_call.1} parent=1 // pred_check_branch
      %11 = sbr.rel (0) target = $region5
    $region4: #{tpu_custom_call.1} parent=1 // pred_region
      %s13 = ssub.s32 128, 128
      %14 = vsyncadd [#allocation4], %s13
      %s16 = sshll.u32 [#allocation3], 4
      %s17 = int_to_ptr.vmem [resolvable:$true] %s16
      %19 = dma.hbm_to_vmem [thread:$0]  %s0, 128, %s17, [#allocation4]
    $region5: #{tpu_custom_call.1} parent=1 // pred_fallthru
      _
    // Predicated region
    $region6: #{tpu_custom_call.1} parent=1 // pred_check
      _
    $region7: #{tpu_custom_call.1} parent=1 // pred_check_branch
      %21 = sbr.rel (0) target = $region9
    $region8: #{tpu_custom_call.1} parent=1 // pred_region
      %s23 = ssub.s32 128, 128
      %24 = vsyncadd [#allocation7], %s23
      %s26 = sshll.u32 [#allocation6], 4
      %s27 = int_to_ptr.vmem [resolvable:$true] %s26
      %29 = dma.hbm_to_vmem [thread:$0]  %s1, 128, %s27, [#allocation7]
    $region9: #{tpu_custom_call.1} parent=1 // pred_fallthru
      _
    // Predicated region
    $region10: #{tpu_custom_call.1} parent=1 // pred_check
      _
    $region11: #{tpu_custom_call.1} parent=1 // pred_check_branch
      %31 = sbr.rel (0) target = $region13
    $region12: #{tpu_custom_call.1} parent=1 // pred_region
      %32 = dma.done [#allocation4], 128
    $region13: #{tpu_custom_call.1} parent=1 // pred_fallthru
      _
    // Predicated region
    $region14: #{tpu_custom_call.1} parent=1 // pred_check
      _
    $region15: #{tpu_custom_call.1} parent=1 // pred_check_branch
      %34 = sbr.rel (0) target = $region17
    $region16: #{tpu_custom_call.1} parent=1 // pred_region
      %35 = dma.done [#allocation7], 128
    $region17: #{tpu_custom_call.1} parent=1 // pred_fallthru
      _
    %v36 = vld [vmem:[#allocation6] sm:$0xff]
    %v37 = vld [vmem:[#allocation3] sm:$0xf]
    %vm38 = vcmask 125952
    %39 = vst.msk [vmem:[#allocation2] sm:$0xf] %vm38, %v37
    %v40 = vld [vmem:[#allocation3] sm:$0xf]
    %42 = vrot.lane.b32.xlu0 %v40, 127
    %v43 = vpop.permute.xlu0 %42
    %vm45 = vcmask 117760
    %46 = vst.msk [vmem:[#allocation2 + $0x4] sm:$0xf] %vm45, %v43
    %v47 = vld [vmem:[#allocation3] sm:$0xf]
    %49 = vrot.lane.b32.xlu0 %v47, 126
    %v50 = vpop.permute.xlu0 %49
    %vm52 = vcmask 109568
    %53 = vst.msk [vmem:[#allocation2 + $0x8] sm:$0xf] %vm52, %v50
    %v54 = vld [vmem:[#allocation2] sm:$0xff]
    %v55 = vld [vmem:[#allocation2 + $0x8] sm:$0xf]
    %vm56 = vcmask 97280
    %v58 = vsel %vm56, %v36, 0
    %vm60 = vcmask 1043456
    %v62 = vsel %vm60, %v55, 0
    %64 = vmatprep.subr.mxu0 0.0
    %65 = vmatpush1.msra.mxu0 %v54
    %66 = vmatprep.subr.mxu0 0.0
    %67 = vmatpush1.msra.mxu0 %v62
    %68 = vmatprep.subr.mxu0 0.0
    %69 = vmatpush1.msra.mxu0 0.0
    %70 = vmatprep.subr.mxu0 0.0
    %71 = vmatpush1.msra.mxu0 0.0
    %72 = vmatprep.subr.mxu0 0.0
    %73 = vmatpush1.msra.mxu0 0.0
    %74 = vmatprep.subr.mxu0 0.0
    %75 = vmatpush1.msra.mxu0 0.0
    %76 = vmatprep.subr.mxu0 0.0
    %77 = vmatpush1.msra.mxu0 0.0
    %78 = vmatprep.subr.mxu0 0.0
    %79 = vmatpush1.msra.mxu0 0.0
    %80 = vmatprep.subr.mxu0 0.0
    %81 = vmatpush1.msra.mxu0 0.0
    %82 = vmatprep.subr.mxu0 0.0
    %83 = vmatpush1.msra.mxu0 0.0
    %84 = vmatprep.subr.mxu0 0.0
    %85 = vmatpush1.msra.mxu0 0.0
    %86 = vmatprep.subr.mxu0 0.0
    %87 = vmatpush1.msra.mxu0 0.0
    %88 = vmatprep.subr.mxu0 0.0
    %89 = vmatpush1.msra.mxu0 0.0
    %90 = vmatprep.subr.mxu0 0.0
    %91 = vmatpush1.msra.mxu0 0.0
    %92 = vmatprep.subr.mxu0 0.0
    %93 = vmatpush1.msra.mxu0 0.0
    %94 = vmatprep.subr.mxu0 0.0
    %95 = vmatpush1.msra.mxu0 0.0
    %96 = vmatprep.subr.mxu0 0.0
    %97 = vmatpush1.msra.mxu0 0.0
    %98 = vmatprep.subr.mxu0 0.0
    %99 = vmatpush1.msra.mxu0 0.0
    %100 = vmatprep.subr.mxu0 0.0
    %101 = vmatpush1.msra.mxu0 0.0
    %102 = vmatprep.subr.mxu0 0.0
    %103 = vmatpush1.msra.mxu0 0.0
    %104 = vmatprep.subr.mxu0 0.0
    %105 = vmatpush1.msra.mxu0 0.0
    %106 = vmatprep.subr.mxu0 0.0
    %107 = vmatpush1.msra.mxu0 0.0
    %108 = vmatprep.subr.mxu0 0.0
    %109 = vmatpush1.msra.mxu0 0.0
    %110 = vmatprep.subr.mxu0 0.0
    %111 = vmatpush1.msra.mxu0 0.0
    %112 = vmatprep.subr.mxu0 0.0
    %113 = vmatpush1.msra.mxu0 0.0
    %114 = vmatprep.subr.mxu0 0.0
    %115 = vmatpush1.msra.mxu0 0.0
    %116 = vmatprep.subr.mxu0 0.0
    %117 = vmatpush1.msra.mxu0 0.0
    %118 = vmatprep.subr.mxu0 0.0
    %119 = vmatpush1.msra.mxu0 0.0
    %120 = vmatprep.subr.mxu0 0.0
    %121 = vmatpush1.msra.mxu0 0.0
    %122 = vmatprep.subr.mxu0 0.0
    %123 = vmatpush1.msra.mxu0 0.0
    %124 = vmatprep.subr.mxu0 0.0
    %125 = vmatpush1.msra.mxu0 0.0
    %126 = vmatprep.subr.mxu0 0.0
    %127 = vmatpush1.msra.mxu0 0.0
    %128 = vmatprep.mubr.f32.mxu0 0.0
    %129 = vmatmul.mubr.f32.gmra.mrb[0].mxu0 %v58
    %v130 = vpop.f32.mrb[0].mxu0
    %v131 = vadd.f32 0.0, %v130
    %v132 = vpop.f32.mrb[0].mxu0
    %133 = vdwg.mxu0
    %134 = vst [vmem:[#allocation8] sm:$0xff] %v131
    %v135 = vld [vmem:[#allocation3 + $0x4] sm:$0xf]
    %136 = vst.msk [vmem:[#allocation2] sm:$0xf] %vm38, %v135
    %v137 = vld [vmem:[#allocation3 + $0x4] sm:$0xf]
    %139 = vrot.lane.b32.xlu0 %v137, 127
    %v140 = vpop.permute.xlu0 %139
    %142 = vst.msk [vmem:[#allocation2 + $0x4] sm:$0xf] %vm45, %v140
    %v143 = vld [vmem:[#allocation3 + $0x4] sm:$0xf]
    %145 = vrot.lane.b32.xlu0 %v143, 126
    %v146 = vpop.permute.xlu0 %145
    %148 = vst.msk [vmem:[#allocation2 + $0x8] sm:$0xf] %vm52, %v146
    %v149 = vld [vmem:[#allocation2] sm:$0xff]
    %v150 = vld [vmem:[#allocation2 + $0x8] sm:$0xf]
    %v152 = vsel %vm60, %v150, 0
    %154 = vmatprep.subr.mxu0 0.0
    %155 = vmatpush1.msra.mxu0 %v149
    %156 = vmatprep.subr.mxu0 0.0
    %157 = vmatpush1.msra.mxu0 %v152
    %158 = vmatprep.subr.mxu0 0.0
    %159 = vmatpush1.msra.mxu0 0.0
    %160 = vmatprep.subr.mxu0 0.0
    %161 = vmatpush1.msra.mxu0 0.0
    %162 = vmatprep.subr.mxu0 0.0
    %163 = vmatpush1.msra.mxu0 0.0
    %164 = vmatprep.subr.mxu0 0.0
    %165 = vmatpush1.msra.mxu0 0.0
    %166 = vmatprep.subr.mxu0 0.0
    %167 = vmatpush1.msra.mxu0 0.0
    %168 = vmatprep.subr.mxu0 0.0
    %169 = vmatpush1.msra.mxu0 0.0
    %170 = vmatprep.subr.mxu0 0.0
    %171 = vmatpush1.msra.mxu0 0.0
    %172 = vmatprep.subr.mxu0 0.0
    %173 = vmatpush1.msra.mxu0 0.0
    %174 = vmatprep.subr.mxu0 0.0
    %175 = vmatpush1.msra.mxu0 0.0
    %176 = vmatprep.subr.mxu0 0.0
    %177 = vmatpush1.msra.mxu0 0.0
    %178 = vmatprep.subr.mxu0 0.0
    %179 = vmatpush1.msra.mxu0 0.0
    %180 = vmatprep.subr.mxu0 0.0
    %181 = vmatpush1.msra.mxu0 0.0
    %182 = vmatprep.subr.mxu0 0.0
    %183 = vmatpush1.msra.mxu0 0.0
    %184 = vmatprep.subr.mxu0 0.0
    %185 = vmatpush1.msra.mxu0 0.0
    %186 = vmatprep.subr.mxu0 0.0
    %187 = vmatpush1.msra.mxu0 0.0
    %188 = vmatprep.subr.mxu0 0.0
    %189 = vmatpush1.msra.mxu0 0.0
    %190 = vmatprep.subr.mxu0 0.0
    %191 = vmatpush1.msra.mxu0 0.0
    %192 = vmatprep.subr.mxu0 0.0
    %193 = vmatpush1.msra.mxu0 0.0
    %194 = vmatprep.subr.mxu0 0.0
    %195 = vmatpush1.msra.mxu0 0.0
    %196 = vmatprep.subr.mxu0 0.0
    %197 = vmatpush1.msra.mxu0 0.0
    %198 = vmatprep.subr.mxu0 0.0
    %199 = vmatpush1.msra.mxu0 0.0
    %200 = vmatprep.subr.mxu0 0.0
    %201 = vmatpush1.msra.mxu0 0.0
    %202 = vmatprep.subr.mxu0 0.0
    %203 = vmatpush1.msra.mxu0 0.0
    %204 = vmatprep.subr.mxu0 0.0
    %205 = vmatpush1.msra.mxu0 0.0
    %206 = vmatprep.subr.mxu0 0.0
    %207 = vmatpush1.msra.mxu0 0.0
    %208 = vmatprep.subr.mxu0 0.0
    %209 = vmatpush1.msra.mxu0 0.0
    %210 = vmatprep.subr.mxu0 0.0
    %211 = vmatpush1.msra.mxu0 0.0
    %212 = vmatprep.subr.mxu0 0.0
    %213 = vmatpush1.msra.mxu0 0.0
    %214 = vmatprep.subr.mxu0 0.0
    %215 = vmatpush1.msra.mxu0 0.0
    %216 = vmatprep.subr.mxu0 0.0
    %217 = vmatpush1.msra.mxu0 0.0
    %218 = vmatprep.mubr.f32.mxu0 0.0
    %219 = vmatmul.mubr.f32.gmra.mrb[0].mxu0 %v58
    %v220 = vpop.f32.mrb[0].mxu0
    %v221 = vadd.f32 0.0, %v220
    %v222 = vpop.f32.mrb[0].mxu0
    %223 = vdwg.mxu0
    %224 = vst [vmem:[#allocation8 + $0x8] sm:$0xff] %v221
    // Predicated region
    $region18: #{tpu_custom_call.1} parent=1 // pred_check
      _
    $region19: #{tpu_custom_call.1} parent=1 // pred_check_branch
      %226 = sbr.rel (0) target = $region21
    $region20: #{tpu_custom_call.1} parent=1 // pred_region
      %s228 = ssub.s32 256, 256
      %229 = vsyncadd [#allocation5], %s228
      %s230 = sshll.u32 [#allocation8], 4
      %s231 = int_to_ptr.vmem [resolvable:$true] %s230
      %236 = dma.vmem_to_hbm [thread:$0]  %s231, 256, %s2, [#allocation5], 128, 128, 8
    $region21: #{tpu_custom_call.1} parent=1 // pred_fallthru
      _
    // Predicated region
    $region22: #{tpu_custom_call.1} parent=1 // pred_check
      _
    $region23: #{tpu_custom_call.1} parent=1 // pred_check_branch
      %238 = sbr.rel (0) target = $region25
    $region24: #{tpu_custom_call.1} parent=1 // pred_region
      %239 = dma.done [#allocation5], 256
    $region25: #{tpu_custom_call.1} parent=1 // pred_fallthru
      _
    %240 = vsyncpa [#allocation4], 1
    %241 = vsyncpa [#allocation7], 1
    %242 = vsyncpa [#allocation5], 1

</llo_original>
